<compile_context>
chip_gen: v7x
topology: tpu7x:2x2x1
jax: 0.10.0
libtpu: 0.0.40
codegen_flags: <defaults>
</compile_context>

<pallas_src>
import math
import numpy as np
import jax
import jax.numpy as jnp
from jax.experimental import pallas as pl
from jax.experimental.pallas import tpu as pltpu


def _normalizer_kernel(stats_ref, x_ref, o_ref):
    # stats_ref is (2, f_lane): row 0 = mean, row 1 = 1/std.  They broadcast
    # over the row (sublane) axis of the (tile_rows, f_lane) data tile.
    # Cast happens on-chip (hidden under the DMA), and the result is written
    # back in the input's dtype to keep writeback bytes minimal.
    x = x_ref[...].astype(jnp.float32)
    mean = stats_ref[0:1, :]
    inv_std = stats_ref[1:2, :]
    o_ref[...] = ((x - mean) * inv_std).astype(o_ref.dtype)


def normalizer_forward(data, stat_sum, stat_sum_squared, count, std_epsilon):
    """data: (N, F); stat_sum / stat_sum_squared: (F,) f32; count, eps: scalars."""
    N, F = data.shape
    out_dtype = data.dtype
    itemsize = jnp.dtype(out_dtype).itemsize

    # ---- O(F) statistics (mirrors Normalizer.mean() / .std()) -------------
    count_f = jnp.asarray(count, jnp.float32)
    eps_f = jnp.asarray(std_epsilon, jnp.float32)
    mean = stat_sum.astype(jnp.float32) / count_f                      # (F,)
    var = stat_sum_squared.astype(jnp.float32) / count_f - mean * mean
    var = jnp.maximum(var, 0.0)      # guard vs. negative f32 cancellation (ref would NaN)
    std = jnp.maximum(jnp.sqrt(var), eps_f)
    inv_std = 1.0 / std              # exact reciprocal, computed once

    # ---- lane-dense layout: make the kernel's last dim a multiple of 128 ---
    pad_rows = 0
    pad_cols = 0
    fold = 128 // math.gcd(F, 128)   # smallest fold making fold*F % 128 == 0
    if fold == 1:
        # F is already a multiple of 128.
        n_rows, f_lane = N, F
        data_2d = data
        mean_l, inv_l = mean, inv_std
    elif fold * F <= 8192:
        # Fold `fold` consecutive rows into one lane-dense row.
        pad_rows = (-N) % fold
        if pad_rows:
            data = jnp.pad(data, ((0, pad_rows), (0, 0)))
        n_rows = (N + pad_rows) // fold
        f_lane = F * fold
        data_2d = data.reshape(n_rows, f_lane)
        mean_l = jnp.tile(mean, (fold,))
        inv_l = jnp.tile(inv_std, (fold,))
    else:
        # Very wide, non-128-multiple F: pad the feature axis instead.
        pad_cols = (-F) % 128
        data_2d = jnp.pad(data, ((0, 0), (0, pad_cols)))
        n_rows, f_lane = N, F + pad_cols
        mean_l = jnp.pad(mean, (0, pad_cols))
        inv_l = jnp.pad(inv_std, (0, pad_cols), constant_values=1.0)
        fold = 1

    # Single resident stats buffer: row 0 = mean, row 1 = 1/std.
    stats = jnp.stack([mean_l, inv_l], axis=0).reshape(2, f_lane)

    # ---- tile-size selection: ~3 MiB per tile buffer ------------------------
    # 3 MiB x (in + out) x 2 pipeline buffers ~= 12 MiB VMEM: fits every
    # generation's scoped default (v5e 16 MiB) and is past the roofline knee.
    bytes_per_row = max(1, f_lane * itemsize)
    target_tile_bytes = 3 << 20
    tile_rows = min(n_rows, max(8, target_tile_bytes // bytes_per_row))
    if tile_rows < n_rows:
        tile_rows = max(8, (tile_rows // 8) * 8)
    # Keep >= 4 grid blocks when rows allow so the "parallel" grid axis can
    # actually shard across both TensorCores on v7x.
    if n_rows >= 32 and pl.cdiv(n_rows, tile_rows) < 4:
        tile_rows = max(8, ((pl.cdiv(n_rows, 4) + 7) // 8) * 8)

    grid = (pl.cdiv(n_rows, tile_rows),)

    data_bytes = n_rows * f_lane * itemsize
    cost = pl.CostEstimate(
        flops=2 * n_rows * f_lane,
        transcendentals=0,
        bytes_accessed=2 * data_bytes + stats.size * 4,
    )

    out_2d = pl.pallas_call(
        _normalizer_kernel,
        out_shape=jax.ShapeDtypeStruct((n_rows, f_lane), out_dtype),
        grid_spec=pltpu.PrefetchScalarGridSpec(
            num_scalar_prefetch=0,
            grid=grid,
            in_specs=[
                pl.BlockSpec((2, f_lane), lambda i: (0, 0)),            # stats (resident)
                pl.BlockSpec((tile_rows, f_lane), lambda i: (i, 0)),    # data tile
            ],
            out_specs=pl.BlockSpec((tile_rows, f_lane), lambda i: (i, 0)),
        ),
        compiler_params=pltpu.CompilerParams(
            dimension_semantics=("parallel",),
            vmem_limit_bytes=32 << 20,
        ),
        cost_estimate=cost,
    )(stats, data_2d)

    # ---- undo the lane-dense layout ----------------------------------------
    if fold > 1:
        out = out_2d.reshape(n_rows * fold, F)[:N]
    elif pad_cols:
        out = out_2d[:, :F]
    else:
        out = out_2d
    return out


if __name__ == "__main__":
    key = jax.random.PRNGKey(0)
    k_acc, k_data = jax.random.split(key)

    N, F = 16, 32          # N samples to normalize, F == `size`
    N_ACC = 10             # number of samples "accumulated" into the buffers

    # Deterministically build the accumulator buffers (as `set_accumulated`
    # would) from synthetic samples so the variance is non-negative.
    acc_samples = jax.random.normal(k_acc, (N_ACC, F), dtype=jnp.float32) * 2.0 + 0.5
    stat_sum = jnp.sum(acc_samples, axis=0)                 # (F,)
    stat_sum_squared = jnp.sum(acc_samples ** 2, axis=0)    # (F,)
    count = jnp.float32(N_ACC)
    std_epsilon = jnp.float32(1e-8)

    # Input data to normalize.
    data = jax.random.normal(k_data, (N, F), dtype=jnp.float32)

    out = normalizer_forward(data, stat_sum, stat_sum_squared, count, std_epsilon)
    out = jax.block_until_ready(out)
    assert out.shape == (N, F) and out.dtype == data.dtype

    # Pure-JAX reference (mirrors the PyTorch forward exactly).
    mean_ref = stat_sum / count
    std_ref = jnp.maximum(
        jnp.sqrt(stat_sum_squared / count - mean_ref ** 2), std_epsilon)
    ref = (data - mean_ref) / std_ref

    np.testing.assert_allclose(np.asarray(out), np.asarray(ref),
                               rtol=1e-5, atol=1e-5)
    print("KERNEL_OK")
</pallas_src>

<mosaic_0001>
module attributes {stable_mosaic.version = 11 : i64} {
  func.func @_normalizer_kernel(%arg0: i32, %arg1: memref<2x128xf32, #tpu.memory_space<vmem>>, %arg2: memref<4x128xf32, #tpu.memory_space<vmem>>, %arg3: memref<4x128xf32, #tpu.memory_space<vmem>>) attributes {dimension_semantics = [#tpu.dimension_semantics<parallel>], iteration_bounds = array<i64: 1>, scalar_prefetch = 0 : i64, scratch_operands = 0 : i64, tpu.core_type = #tpu.core_type<tc>, window_params = [{pipeline_mode = #tpu.pipeline_mode<synchronous>, transform_indices = @transform_0, window_bounds = array<i64: 2, 128>}, {transform_indices = @transform_1, window_bounds = array<i64: 4, 128>}, {transform_indices = @transform_2, window_bounds = array<i64: 4, 128>}]} {
    %c0 = arith.constant 0 : index
    %c0_0 = arith.constant 0 : index
    %0 = vector.load %arg2[%c0, %c0_0] : memref<4x128xf32, #tpu.memory_space<vmem>>, vector<4x128xf32>
    %c0_1 = arith.constant 0 : index
    %c0_2 = arith.constant 0 : index
    %1 = vector.load %arg1[%c0_1, %c0_2] : memref<2x128xf32, #tpu.memory_space<vmem>>, vector<1x128xf32>
    %c1 = arith.constant 1 : index
    %c0_3 = arith.constant 0 : index
    %2 = vector.load %arg1[%c1, %c0_3] : memref<2x128xf32, #tpu.memory_space<vmem>>, vector<1x128xf32>
    %3 = vector.broadcast %1 : vector<1x128xf32> to vector<4x128xf32>
    %4 = arith.subf %0, %3 : vector<4x128xf32>
    %5 = vector.broadcast %2 : vector<1x128xf32> to vector<4x128xf32>
    %6 = arith.mulf %4, %5 : vector<4x128xf32>
    %c0_4 = arith.constant 0 : index
    %c0_5 = arith.constant 0 : index
    %7 = vector.load %arg3[%c0_4, %c0_5] : memref<4x128xf32, #tpu.memory_space<vmem>>, vector<4x128xf32>
    tpu.vector_store %arg3[%c0_4, %c0_5], %6 {strides = array<i32>} : memref<4x128xf32, #tpu.memory_space<vmem>>, vector<4x128xf32>,
    return
  }
  func.func @transform_0(%arg0: i32) -> (i32, i32) {
    %c0_i32 = arith.constant 0 : i32
    %c0_i32_0 = arith.constant 0 : i32
    %c0_i32_1 = arith.constant 0 : i32
    return %c0_i32, %c0_i32_0 : i32, i32
  }
  func.func @transform_1(%arg0: i32) -> (i32, i32) {
    %c0_i32 = arith.constant 0 : i32
    %c0_i32_0 = arith.constant 0 : i32
    return %arg0, %c0_i32 : i32, i32
  }
  func.func @transform_2(%arg0: i32) -> (i32, i32) {
    %c0_i32 = arith.constant 0 : i32
    %c0_i32_0 = arith.constant 0 : i32
    return %arg0, %c0_i32 : i32, i32
  }
}

</mosaic_0001>

<llo_original>
// kernel: tpu_custom_call.1
$region0: #{tpu_custom_call.1}
  #allocation0 [shape = 'u32[]', space=smem, size = 0x4, offset = 0x4, fixed_abs, tag = 'smem constant byte address 0x4 - core index']
  #allocation1 [shape = 'u32[144,128]{1,0:T(1,128)}', space=vmem, size = 0x12000, scoped, tag = 'internal scratch']
  %s0 = inlined_call_operand.hbm [shape: f32[2,128], index: 0, kind: input, shape index: {}]
  %s1 = inlined_call_operand.hbm [shape: f32[4,128], index: 1, kind: input, shape index: {}]
  %s2 = inlined_call_operand.hbm [shape: f32[4,128], index: 2, kind: output, shape index: {}]
  %s3 = sld [smem:[#allocation0]]
  $region26: #{tpu_custom_call.1} parent=0
    _
  %s5 = ssub.s32 1, %s3
  %s6 = scalar_select 0, %s5, %s3
  $region1: #{tpu_custom_call.1} parent=0
    #allocation2 [shape = 'u8[1024]{0}', space=vmem, size = 0x400, scoped, tag = 'input window, operand 0, single buffered']
    #allocation3 [shape = 's32[1]{0}', space=sflag, size = 0x4, scoped, tag = 'scoped memory for tpu_custom_call.1']
    #allocation4 [shape = 's32[1]{0}', space=sflag, size = 0x4, scoped, tag = 'scoped memory for tpu_custom_call.1']
    #allocation5 [shape = 'u8[2048]{0}', space=vmem, size = 0x800, scoped, tag = 'input window, operand 1, single buffered']
    #allocation6 [shape = 's32[1]{0}', space=sflag, size = 0x4, scoped, tag = 'scoped memory for tpu_custom_call.1']
    #allocation7 [shape = 'u8[2048]{0}', space=vmem, size = 0x800, scoped, tag = 'output window, operand 0, single buffered']
    %7 = vsyncpa [#allocation3], 0
    %8 = vsyncpa [#allocation6], 0
    %9 = vsyncpa [#allocation4], 0
    // Predicated region
    $region2: #{tpu_custom_call.1} parent=1 // pred_check
      _
    $region3: #{tpu_custom_call.1} parent=1 // pred_check_branch
      %11 = sbr.rel (0) target = $region5
    $region4: #{tpu_custom_call.1} parent=1 // pred_region
      %s13 = ssub.s32 32, 32
      %14 = vsyncadd [#allocation3], %s13
      %s16 = sshll.u32 [#allocation2], 4
      %s17 = int_to_ptr.vmem [resolvable:$true] %s16
      %19 = dma.hbm_to_vmem [thread:$0]  %s0, 32, %s17, [#allocation3]
    $region5: #{tpu_custom_call.1} parent=1 // pred_fallthru
      _
    // Predicated region
    $region6: #{tpu_custom_call.1} parent=1 // pred_check
      _
    $region7: #{tpu_custom_call.1} parent=1 // pred_check_branch
      %21 = sbr.rel (0) target = $region9
    $region8: #{tpu_custom_call.1} parent=1 // pred_region
      %s23 = ssub.s32 64, 64
      %24 = vsyncadd [#allocation6], %s23
      %s26 = sshll.u32 [#allocation5], 4
      %s27 = int_to_ptr.vmem [resolvable:$true] %s26
      %29 = dma.hbm_to_vmem [thread:$0]  %s1, 64, %s27, [#allocation6]
    $region9: #{tpu_custom_call.1} parent=1 // pred_fallthru
      _
    // Predicated region
    $region10: #{tpu_custom_call.1} parent=1 // pred_check
      _
    $region11: #{tpu_custom_call.1} parent=1 // pred_check_branch
      %31 = sbr.rel (0) target = $region13
    $region12: #{tpu_custom_call.1} parent=1 // pred_region
      %32 = dma.done [#allocation3], 32
    $region13: #{tpu_custom_call.1} parent=1 // pred_fallthru
      _
    // Predicated region
    $region14: #{tpu_custom_call.1} parent=1 // pred_check
      _
    $region15: #{tpu_custom_call.1} parent=1 // pred_check_branch
      %34 = sbr.rel (0) target = $region17
    $region16: #{tpu_custom_call.1} parent=1 // pred_region
      %35 = dma.done [#allocation6], 64
    $region17: #{tpu_custom_call.1} parent=1 // pred_fallthru
      _
    %v36 = vld [vmem:[#allocation5] sm:$0xf]
    %v37 = vld [vmem:[#allocation2] sm:$0x1]
    %v38 = vld [vmem:[#allocation2 + $0x1] sm:$0x1]
    %v39 = vlaneseq
    %v40 = vshrl.u32 %v39, 7
    %v41 = vsub.s32 0, %v40
    %v42 = vrot.slane %v37, %v41
    %v43 = vsub.f32 %v36, %v42
    %v44 = vlaneseq
    %v45 = vshrl.u32 %v44, 7
    %v46 = vsub.s32 0, %v45
    %v47 = vrot.slane %v38, %v46
    %v48 = vmul.f32 %v43, %v47
    %49 = vst [vmem:[#allocation7] sm:$0xf] %v48
    // Predicated region
    $region18: #{tpu_custom_call.1} parent=1 // pred_check
      _
    $region19: #{tpu_custom_call.1} parent=1 // pred_check_branch
      %51 = sbr.rel (0) target = $region21
    $region20: #{tpu_custom_call.1} parent=1 // pred_region
      %s53 = ssub.s32 64, 64
      %54 = vsyncadd [#allocation4], %s53
      %s56 = sshll.u32 [#allocation7], 4
      %s57 = int_to_ptr.vmem [resolvable:$true] %s56
      %59 = dma.vmem_to_hbm [thread:$0]  %s57, 64, %s2, [#allocation4]
    $region21: #{tpu_custom_call.1} parent=1 // pred_fallthru
      _
    // Predicated region
    $region22: #{tpu_custom_call.1} parent=1 // pred_check
      _
    $region23: #{tpu_custom_call.1} parent=1 // pred_check_branch
      %61 = sbr.rel (0) target = $region25
    $region24: #{tpu_custom_call.1} parent=1 // pred_region
      %62 = dma.done [#allocation4], 64
    $region25: #{tpu_custom_call.1} parent=1 // pred_fallthru
      _
    %63 = vsyncpa [#allocation3], 1
    %64 = vsyncpa [#allocation6], 1
    %65 = vsyncpa [#allocation4], 1

</llo_original>
